<compile_context>
chip_gen: v7x
topology: tpu7x:2x2x1
jax: 0.10.0
libtpu: 0.0.40
codegen_flags: <defaults>
</compile_context>

<pallas_src>
import functools
import math

import jax
import jax.numpy as jnp
from jax.experimental import pallas as pl
from jax.experimental.pallas import tpu as pltpu


# --------------------- generation-aware VMEM budget / tiles ------------------

def _tpu_vmem_capacity_bytes():
    try:
        info = pltpu.get_tpu_info()
        for name in ("vmem_capacity_bytes", "vmem_size_bytes", "vmem_bytes"):
            cap = getattr(info, name, None)
            if cap:
                return int(cap)
    except Exception:
        pass
    return 64 * 1024 * 1024  # conservative fallback (v7x per-TC VMEM)


_VMEM_CAP = _tpu_vmem_capacity_bytes()
_VMEM_BUDGET = min(int(_VMEM_CAP * 0.75), 100 * 1024 * 1024)
if _VMEM_CAP >= 96 * 1024 * 1024:      # v5e / v6e: 128 MiB VMEM
    _TM_TARGET, _TN_TARGET = 512, 1024
else:                                   # v7x: 64 MiB per TensorCore
    _TM_TARGET, _TN_TARGET = 256, 512


def _round_up(x, m):
    return ((x + m - 1) // m) * m


def _pick_tile(size, target, align):
    """Largest multiple of `align` dividing `size` and <= target (else full size)."""
    if size % align != 0:
        return size
    t = min(size, max(align, (target // align) * align))
    while size % t != 0:
        t -= align
    return t


def _fl_tiles(M, K, N, ln, has_res, out_bytes):
    """Pick (tm, tn) against a worst-case resident-VMEM estimate.

    Shrinks tn first (keeps tm large so the weight is re-streamed from HBM as
    few times as possible), then tm (caps the big-K MLP-down call on v7x).
    """
    tm_t, tn_t = _TM_TARGET, _TN_TARGET
    budget = int(_VMEM_BUDGET * 0.8)
    while True:
        tm = _pick_tile(M, tm_t, 16)      # 16: bf16 sublane packing
        tn = _pick_tile(N, tn_t, 128)     # 128: lane-dense stores
        need = (2 * tm * K * 2            # x block, bf16, double-buffered
                + 2 * K * tn * 2          # weight block, bf16, double-buffered
                + 2 * tn * 4              # bias
                + 2 * tm * tn * out_bytes)
        if ln:
            need += tm * K * 2 + 2 * 2 * K * 4   # LN scratch + gamma/beta
        if has_res:
            need += 2 * tm * tn * 2
        if need <= budget or (tm_t <= 16 and tn_t <= 128):
            return tm, tn
        if tn_t > 128:
            tn_t //= 2
        else:
            tm_t //= 2


# --------------------------- fused linear kernel ----------------------------
# (optional LayerNorm, cached per row block) -> bf16 matmul (f32 acc) -> +bias
# -> (GELU) -> (+residual)

def _fused_linear_kernel(*refs, ln, act, residual, eps):
    i = 0
    x_ref = refs[i]; i += 1
    if ln:
        g_ref = refs[i]; beta_ref = refs[i + 1]; i += 2
    w_ref = refs[i]; i += 1
    bias_ref = refs[i]; i += 1
    if residual:
        res_ref = refs[i]; i += 1
    o_ref = refs[i]; i += 1

    if ln:
        xn_ref = refs[i]; i += 1   # VMEM scratch (tm, K) bf16

        # Recompute LayerNorm only when the M-row block changes (inner N index 0).
        @pl.when(pl.program_id(1) == 0)
        def _():
            x = x_ref[...].astype(jnp.float32)
            mean = jnp.mean(x, axis=-1, keepdims=True)
            var = jnp.mean(jnp.square(x - mean), axis=-1, keepdims=True)
            xn = (x - mean) * jax.lax.rsqrt(var + eps) * g_ref[...] + beta_ref[...]
            xn_ref[...] = xn.astype(jnp.bfloat16)

        xin = xn_ref[...]
    else:
        xin = x_ref[...]           # already bf16

    acc = jnp.dot(xin, w_ref[...], preferred_element_type=jnp.float32)
    acc = acc + bias_ref[...]
    if act == "gelu":
        # TODO(synk): tanh-approx GELU (PyTorch nn.GELU default is exact erf).
        acc = jax.nn.gelu(acc)
    if residual:
        acc = acc + res_ref[...].astype(jnp.float32)
    o_ref[...] = acc.astype(o_ref.dtype)


def fused_linear(x, w, b, *, gamma=None, beta=None, residual=None, act=None,
                 eps=1e-5, out_dtype=jnp.bfloat16):
    """x:(M,K) @ w:(K,N) + b, with optional fused pre-LN / GELU / residual."""
    M, K = x.shape
    Kw, N = w.shape
    assert K == Kw
    ln = gamma is not None
    has_res = residual is not None
    out_bytes = jnp.dtype(out_dtype).itemsize

    tm, tn = _fl_tiles(M, K, N, ln, has_res, out_bytes)

    kernel = functools.partial(_fused_linear_kernel, ln=ln, act=act,
                               residual=has_res, eps=eps)

    # x row block is resident across the inner N axis (index_map constant in j);
    # the weight is the only operand streamed from HBM per N tile.
    in_specs = [pl.BlockSpec((tm, K), lambda i, j: (i, 0))]
    args = [x.astype(jnp.bfloat16)]
    if ln:
        in_specs += [pl.BlockSpec((1, K), lambda i, j: (0, 0)),
                     pl.BlockSpec((1, K), lambda i, j: (0, 0))]
        args += [gamma.reshape(1, K).astype(jnp.float32),
                 beta.reshape(1, K).astype(jnp.float32)]
    in_specs += [pl.BlockSpec((K, tn), lambda i, j: (0, j)),
                 pl.BlockSpec((1, tn), lambda i, j: (0, j))]
    args += [w.astype(jnp.bfloat16), b.reshape(1, N).astype(jnp.float32)]
    if has_res:
        in_specs.append(pl.BlockSpec((tm, tn), lambda i, j: (i, j)))
        args.append(residual.astype(jnp.bfloat16))

    scratch_shapes = [pltpu.VMEM((tm, K), jnp.bfloat16)] if ln else []

    return pl.pallas_call(
        kernel,
        out_shape=jax.ShapeDtypeStruct((M, N), out_dtype),
        grid=(M // tm, N // tn),
        in_specs=in_specs,
        out_specs=pl.BlockSpec((tm, tn), lambda i, j: (i, j)),
        scratch_shapes=scratch_shapes,
        compiler_params=pltpu.CompilerParams(
            dimension_semantics=("parallel", "arbitrary" if ln else "parallel"),
            vmem_limit_bytes=_VMEM_BUDGET),
    )(*args)


# --------------------- patch embed + cls + pos-emb kernel --------------------
# Patches are pre-padded in glue with one leading zero row (cls slot) and
# trailing zero rows (seq padding); base = cls/pos/bias folded at init, so the
# kernel epilogue is one dense (seq_pad, D) store.

def _embed_kernel(patches_ref, w_ref, base_ref, o_ref):
    proj = jnp.dot(patches_ref[0], w_ref[...], preferred_element_type=jnp.float32)
    o_ref[0] = (proj + base_ref[...]).astype(o_ref.dtype)


def patch_embed(patches_pad, w, base, out_dtype=jnp.bfloat16):
    B, Sp, Cpp = patches_pad.shape
    D = w.shape[1]
    return pl.pallas_call(
        _embed_kernel,
        out_shape=jax.ShapeDtypeStruct((B, Sp, D), out_dtype),
        grid=(B,),
        in_specs=[
            pl.BlockSpec((1, Sp, Cpp), lambda b: (b, 0, 0)),
            pl.BlockSpec((Cpp, D), lambda b: (0, 0)),
            pl.BlockSpec((Sp, D), lambda b: (0, 0)),
        ],
        out_specs=pl.BlockSpec((1, Sp, D), lambda b: (b, 0, 0)),
        compiler_params=pltpu.CompilerParams(
            dimension_semantics=("parallel",),
            vmem_limit_bytes=_VMEM_BUDGET),
    )(patches_pad.astype(jnp.bfloat16), w.astype(jnp.bfloat16),
      base.astype(jnp.float32))


# ----------------------- multi-head attention kernel ------------------------
# grid=(B, heads); BlockSpec delivers each head's (Sp, dh) slab, output is a
# full-block dense store.  1/sqrt(dh) is pre-folded into the Q projection.
# TODO(synk): for real ViT dims (dh=64) pack 2 heads per kernel invocation to
# raise MXU utilization on v6e/v7x (256-deep MXU).

def _mha_kernel(q_ref, k_ref, v_ref, o_ref, *, s_real):
    q = q_ref[0, 0]                                   # (Sp, dh) bf16 (pre-scaled)
    k = k_ref[0, 0]
    v = v_ref[0, 0]
    # q @ k^T without materializing a transpose: contract last dims of both.
    s = jax.lax.dot_general(q, k, (((1,), (1,)), ((), ())),
                            preferred_element_type=jnp.float32)   # (Sp, Sp) f32
    Sp = s.shape[-1]
    key_idx = jax.lax.broadcasted_iota(jnp.int32, (1, Sp), 1)
    s = jnp.where(key_idx < s_real, s, -1e30)         # mask padded key positions
    s = s - jnp.max(s, axis=-1, keepdims=True)
    p = jnp.exp(s)
    p = p * pl.reciprocal(jnp.sum(p, axis=-1, keepdims=True), approx=True)
    out = jnp.dot(p.astype(jnp.bfloat16), v, preferred_element_type=jnp.float32)
    o_ref[0, 0] = out.astype(o_ref.dtype)


def multi_head_attention(q, k, v, *, s_real, out_dtype=jnp.bfloat16):
    B, H, Sp, dh = q.shape
    kernel = functools.partial(_mha_kernel, s_real=s_real)
    spec = pl.BlockSpec((1, 1, Sp, dh), lambda b, h: (b, h, 0, 0))
    return pl.pallas_call(
        kernel,
        out_shape=jax.ShapeDtypeStruct((B, H, Sp, dh), out_dtype),
        grid=(B, H),
        in_specs=[spec, spec, spec],
        out_specs=spec,
        compiler_params=pltpu.CompilerParams(
            dimension_semantics=("parallel", "parallel"),
            vmem_limit_bytes=_VMEM_BUDGET),
    )(q, k, v)


# --------------------------- parameter construction -------------------------

def init_params(key, *, image_size, patch_size, in_channels, num_classes,
                dim, depth, heads, mlp_dim):
    num_patches = (image_size // patch_size) ** 2
    seq = num_patches + 1
    seq_pad = _round_up(seq, 32)           # sublane-friendly padded sequence
    mlp_pad = _round_up(mlp_dim, 128)      # lane-dense MLP hidden
    cls_pad = _round_up(num_classes, 128)  # lane-dense classifier output
    dh = dim // heads
    keys = iter(jax.random.split(key, 8 + 4 * depth))

    def normal(shape, std=0.02):
        return (std * jax.random.normal(next(keys), shape)).astype(jnp.float32)

    pos = jax.random.normal(next(keys), (seq, dim)).astype(jnp.float32)
    cls_token = jax.random.normal(next(keys), (1, dim)).astype(jnp.float32)
    patch_b = jnp.zeros((dim,), jnp.float32)

    # base slab added in the patch-embedding kernel:
    #   row 0            = cls_token + pos[0]        (patch row 0 is zeros)
    #   rows 1..P        = pos[1..P] + patch_bias    (bias folded here)
    #   padded rows      = 0
    base = jnp.zeros((seq_pad, dim), jnp.float32)
    base = base.at[0].set(cls_token[0] + pos[0])
    base = base.at[1:seq].set(pos[1:] + patch_b[None, :])

    params = {
        # Conv2d(C, dim, k=p, s=p) expressed as (C*p*p, dim) matmul weight (bf16).
        "patch_w": normal((in_channels * patch_size * patch_size, dim)).astype(jnp.bfloat16),
        "embed_base": base,
        "head_ln_g": jnp.ones((dim,), jnp.float32),
        "head_ln_b": jnp.zeros((dim,), jnp.float32),
        "head_w": jnp.pad(normal((dim, num_classes)),
                          ((0, 0), (0, cls_pad - num_classes))).astype(jnp.bfloat16),
        "head_b": jnp.zeros((cls_pad,), jnp.float32),
        "blocks": [],
    }
    for _ in range(depth):
        w_qkv = normal((dim, 3 * dim))
        # Fold the 1/sqrt(dh) softmax scale into the Q projection (zero runtime cost).
        w_qkv = w_qkv.at[:, :dim].multiply(1.0 / math.sqrt(dh))
        b_qkv = jnp.zeros((3 * dim,), jnp.float32)
        b_qkv = b_qkv.at[:dim].multiply(1.0 / math.sqrt(dh))
        blk = {
            "ln1_g": jnp.ones((dim,), jnp.float32),
            "ln1_b": jnp.zeros((dim,), jnp.float32),
            "w_qkv": w_qkv.astype(jnp.bfloat16),          # fused Q|K|V
            "b_qkv": b_qkv,
            "wo": normal((dim, dim)).astype(jnp.bfloat16),
            "bo": jnp.zeros((dim,), jnp.float32),
            "ln2_g": jnp.ones((dim,), jnp.float32),
            "ln2_b": jnp.zeros((dim,), jnp.float32),
            "w1": jnp.pad(normal((dim, mlp_dim)),
                          ((0, 0), (0, mlp_pad - mlp_dim))).astype(jnp.bfloat16),
            "b1": jnp.zeros((mlp_pad,), jnp.float32),
            "w2": jnp.pad(normal((mlp_dim, dim)),
                          ((0, mlp_pad - mlp_dim), (0, 0))).astype(jnp.bfloat16),
            "b2": jnp.zeros((dim,), jnp.float32),
        }
        params["blocks"].append(blk)
    meta = dict(seq=seq, seq_pad=seq_pad, mlp_pad=mlp_pad, num_classes=num_classes)
    return params, meta


# ------------------------------- forward pass -------------------------------

def transformer_block(p, x2d, *, batch, seq, seq_pad, heads, dim):
    dh = dim // heads
    # LN1 + fused QKV projection (scale pre-folded into Q)           (1 kernel)
    qkv = fused_linear(x2d, p["w_qkv"], p["b_qkv"], gamma=p["ln1_g"], beta=p["ln1_b"])
    # Head split in glue (layout plumbing only), per-(batch, head) grid.
    qkv = qkv.reshape(batch, seq_pad, 3, heads, dh).transpose(2, 0, 3, 1, 4)
    attn = multi_head_attention(qkv[0], qkv[1], qkv[2], s_real=seq)   # (B,H,Sp,dh)
    attn2d = attn.transpose(0, 2, 1, 3).reshape(batch * seq_pad, dim)
    # Output projection + residual                                    (1 kernel)
    x2d = fused_linear(attn2d, p["wo"], p["bo"], residual=x2d)
    # LN2 + MLP up + GELU                                             (1 kernel)
    h = fused_linear(x2d, p["w1"], p["b1"], gamma=p["ln2_g"], beta=p["ln2_b"],
                     act="gelu")
    # MLP down + residual                                             (1 kernel)
    return fused_linear(h, p["w2"], p["b2"], residual=x2d)


def vit_forward(params, meta, x, *, patch_size, heads):
    # x layout: NCHW float32.  Dropout is identity (eval-mode forward).
    B, C, H, W = x.shape
    ph, pw = H // patch_size, W // patch_size
    num_patches = ph * pw
    dim = params["patch_w"].shape[1]
    seq, seq_pad = meta["seq"], meta["seq_pad"]

    # Patch extraction (pure layout glue); per-patch flattening order (C, ph, pw)
    # matches Conv2d weight (dim, C, p, p).reshape(dim, -1).T
    patches = (x.reshape(B, C, ph, patch_size, pw, patch_size)
                .transpose(0, 2, 4, 1, 3, 5)
                .reshape(B, num_patches, C * patch_size * patch_size))
    # One leading zero row (cls slot) + trailing zero rows (seq padding) so the
    # embedding kernel does a single dense (seq_pad, D) store.
    patches_pad = jnp.pad(patches, ((0, 0), (1, seq_pad - seq), (0, 0)))

    # Patch projection + cls token + positional embedding, fused (1 kernel).
    xseq = patch_embed(patches_pad, params["patch_w"], params["embed_base"])
    x2d = xseq.reshape(B * seq_pad, dim)

    for blk in params["blocks"]:
        x2d = transformer_block(blk, x2d, batch=B, seq=seq, seq_pad=seq_pad,
                                heads=heads, dim=dim)

    cls_out = x2d.reshape(B, seq_pad, dim)[:, 0]          # (B, dim)
    # Fused LN + classifier head (output padded to 128 lanes, sliced in glue).
    logits = fused_linear(cls_out, params["head_w"], params["head_b"],
                          gamma=params["head_ln_g"], beta=params["head_ln_b"],
                          out_dtype=jnp.float32)
    return logits[:, :meta["num_classes"]]


# ---------------------------------- main ------------------------------------

if __name__ == "__main__":
    image_size, patch_size, in_channels = 16, 4, 4
    num_classes, dim, depth, heads, mlp_dim = 10, 32, 2, 4, 64
    batch = 2

    key = jax.random.PRNGKey(0)
    k_params, k_x = jax.random.split(key)
    params, meta = init_params(
        k_params,
        image_size=image_size, patch_size=patch_size, in_channels=in_channels,
        num_classes=num_classes, dim=dim, depth=depth, heads=heads, mlp_dim=mlp_dim,
    )
    x = jax.random.normal(k_x, (batch, in_channels, image_size, image_size), jnp.float32)

    logits = vit_forward(params, meta, x, patch_size=patch_size, heads=heads)
    jax.block_until_ready(logits)
    assert logits.shape == (batch, num_classes), logits.shape
    print("KERNEL_OK")
</pallas_src>

<mosaic_0001>
module attributes {stable_mosaic.version = 11 : i64} {
  func.func @_embed_kernel(%arg0: i32, %arg1: memref<1x32x64xbf16, #tpu.memory_space<vmem>>, %arg2: memref<64x32xbf16, #tpu.memory_space<vmem>>, %arg3: memref<32x32xf32, #tpu.memory_space<vmem>>, %arg4: memref<1x32x32xbf16, #tpu.memory_space<vmem>>) attributes {dimension_semantics = [#tpu.dimension_semantics<parallel>], iteration_bounds = array<i64: 2>, scalar_prefetch = 0 : i64, scratch_operands = 0 : i64, tpu.core_type = #tpu.core_type<tc>, window_params = [{transform_indices = @transform_0, window_bounds = array<i64: 1, 32, 64>}, {pipeline_mode = #tpu.pipeline_mode<synchronous>, transform_indices = @transform_1, window_bounds = array<i64: 64, 32>}, {pipeline_mode = #tpu.pipeline_mode<synchronous>, transform_indices = @transform_2, window_bounds = array<i64: 32, 32>}, {transform_indices = @transform_3, window_bounds = array<i64: 1, 32, 32>}]} {
    %c0 = arith.constant 0 : index
    %c0_0 = arith.constant 0 : index
    %c0_1 = arith.constant 0 : index
    %0 = vector.load %arg1[%c0, %c0_0, %c0_1] : memref<1x32x64xbf16, #tpu.memory_space<vmem>>, vector<1x32x64xbf16>
    %1 = vector.shape_cast %0 : vector<1x32x64xbf16> to vector<32x64xbf16>
    %c0_2 = arith.constant 0 : index
    %c0_3 = arith.constant 0 : index
    %2 = vector.load %arg2[%c0_2, %c0_3] : memref<64x32xbf16, #tpu.memory_space<vmem>>, vector<64x32xbf16>
    %cst = arith.constant dense<0.000000e+00> : vector<32x32xf32>
    %3 = tpu.matmul %1, %2, %cst {dimension_numbers = #tpu.dot_dimension_numbers<[1], [0], [0], [1], [0, 0, 1, 1], [], []>} : vector<32x64xbf16>, vector<64x32xbf16>, vector<32x32xf32> -> vector<32x32xf32>
    %c0_4 = arith.constant 0 : index
    %c0_5 = arith.constant 0 : index
    %4 = vector.load %arg3[%c0_4, %c0_5] : memref<32x32xf32, #tpu.memory_space<vmem>>, vector<32x32xf32>
    %5 = arith.addf %3, %4 : vector<32x32xf32>
    %6 = arith.truncf %5 : vector<32x32xf32> to vector<32x32xbf16>
    %c0_6 = arith.constant 0 : index
    %c0_7 = arith.constant 0 : index
    %c0_8 = arith.constant 0 : index
    %7 = vector.load %arg4[%c0_6, %c0_7, %c0_8] : memref<1x32x32xbf16, #tpu.memory_space<vmem>>, vector<1x32x32xbf16>
    %8 = vector.shape_cast %7 : vector<1x32x32xbf16> to vector<32x32xbf16>
    %9 = vector.shape_cast %6 : vector<32x32xbf16> to vector<1x32x32xbf16>
    tpu.vector_store %arg4[%c0_6, %c0_7, %c0_8], %9 {strides = array<i32>} : memref<1x32x32xbf16, #tpu.memory_space<vmem>>, vector<1x32x32xbf16>,
    return
  }
  func.func @transform_0(%arg0: i32) -> (i32, i32, i32) {
    %c0_i32 = arith.constant 0 : i32
    %c0_i32_0 = arith.constant 0 : i32
    %c0_i32_1 = arith.constant 0 : i32
    return %arg0, %c0_i32, %c0_i32_0 : i32, i32, i32
  }
  func.func @transform_1(%arg0: i32) -> (i32, i32) {
    %c0_i32 = arith.constant 0 : i32
    %c0_i32_0 = arith.constant 0 : i32
    %c0_i32_1 = arith.constant 0 : i32
    return %c0_i32, %c0_i32_0 : i32, i32
  }
  func.func @transform_2(%arg0: i32) -> (i32, i32) {
    %c0_i32 = arith.constant 0 : i32
    %c0_i32_0 = arith.constant 0 : i32
    %c0_i32_1 = arith.constant 0 : i32
    return %c0_i32, %c0_i32_0 : i32, i32
  }
  func.func @transform_3(%arg0: i32) -> (i32, i32, i32) {
    %c0_i32 = arith.constant 0 : i32
    %c0_i32_0 = arith.constant 0 : i32
    %c0_i32_1 = arith.constant 0 : i32
    return %arg0, %c0_i32, %c0_i32_0 : i32, i32, i32
  }
}

</mosaic_0001>

<llo_original>
// kernel: tpu_custom_call.1
$region0: #{tpu_custom_call.1}
  #allocation0 [shape = 'u32[]', space=smem, size = 0x4, offset = 0x4, fixed_abs, tag = 'smem constant byte address 0x4 - core index']
  #allocation1 [shape = 'u32[144,128]{1,0:T(1,128)}', space=vmem, size = 0x12000, scoped, tag = 'internal scratch']
  %s0 = inlined_call_operand.vmem [shape: bf16[2,32,64], index: 0, kind: input, shape index: {}]
  %s1 = inlined_call_operand.vmem [shape: bf16[64,32], index: 1, kind: input, shape index: {}]
  %s2 = inlined_call_operand.hbm [shape: f32[32,32], index: 2, kind: input, shape index: {}]
  %s3 = inlined_call_operand.hbm [shape: bf16[2,32,32], index: 3, kind: output, shape index: {}]
  %s4 = sld [smem:[#allocation0]]
  $region49: #{tpu_custom_call.1} parent=0
    _
  %s6 = ssub.s32 1, %s4
  %s7 = scalar_select 0, %s6, %s4
  $region1: #{tpu_custom_call.1} parent=0
    #allocation2 [shape = 'u8[16384]{0}', space=vmem, size = 0x4000, scoped, tag = 'input window, operand 2, single buffered']
    #allocation3 [shape = 's32[2]{0}', space=sflag, size = 0x8, scoped, tag = 'scoped memory for tpu_custom_call.1']
    #allocation4 [shape = 's32[2]{0}', space=sflag, size = 0x8, scoped, tag = 'scoped memory for tpu_custom_call.1']
    #allocation5 [shape = 'u8[16384]{0}', space=vmem, size = 0x4000, scoped, tag = 'output window, operand 0']
    %8 = vsyncpa [#allocation3], 0
    %9 = vsyncpa [#allocation4], 0
    %s10 = scalar_lea.sflag [#allocation4], 1
    %11 = vsyncpa %s10, 0
    loop: start=0, step=1, limit=4
    $region2: #{tpu_custom_call.1} parent=1 // loop_pre_header
      _
    $region3: #{tpu_custom_call.1} parent=1 // loop_header
      %s13 = sphi 0, %s17
      %p14 = scmp.ge.s32.totalorder %s13, 4
      %s23 = sphi 0, %s25
      %s26 = sphi 0, %s23
      %s27 = sphi 0, %s26
      %s43 = sphi 0, %s27
      %s47 = sphi 0, %s47
      %s49 = sphi 0, %s47
      %s50 = sphi 0, %s49
      %s64 = sphi 0, %s50
      %s68 = sphi 0, %s68
      %s70 = sphi 0, %s68
      %s71 = sphi 0, %s70
      %s85 = sphi 0, %s71
      %s91 = sphi 0, %s93
      %s94 = sphi 0, %s91
      %s95 = sphi 0, %s94
      %s111 = sphi 0, %s95
    $region4: #{tpu_custom_call.1} parent=1 // loop_header_branch
      %16 = sbr.rel (%p14) target = $region8
    $region5: #{tpu_custom_call.1} parent=1 // loop_body
      %s18 = ssub.s32 %s13, 1
      %s19 = ssub.s32 %s13, 2
      %s20 = sadd.s32 %s13, 1
      %s21 = ssub.s32 %s13, %s20
      %p22 = scmp.eq.s32.totalorder %s21, 0
      %s24 = sadd.s32 %s23, 1
      %s25 = scalar_select %p22, %s23, %s24
      %p28 = pneg %p22
      %p29 = scmp.eq.s32.totalorder %s13, 1
      %p30 = por %p28, %p29
      %p31 = scmp.ne.s32.totalorder %s23, %s26
      %p32 = scmp.eq.s32.totalorder %s13, 0
      %p33 = por %p31, %p32
      %p34 = scmp.ne.s32.totalorder %s23, %s26
      %p35 = scmp.eq.s32.totalorder %s18, 1
      %p36 = por %p34, %p35
      %p37 = scmp.ne.s32.totalorder %s26, %s27
      %p38 = scmp.eq.s32.totalorder %s18, 0
      %p39 = por %p37, %p38
      %p40 = scmp.ne.s32.totalorder %s26, %s27
      %p41 = scmp.eq.s32.totalorder %s19, 1
      %p42 = por %p40, %p41
      %p44 = scmp.ne.s32.totalorder %s27, %s43
      %p45 = scmp.eq.s32.totalorder %s19, 0
      %p46 = por %p44, %p45
      %s48 = sadd.s32 %s47, 1
      %p51 = scmp.eq.s32.totalorder %s13, 1
      %p52 = scmp.ne.s32.totalorder %s47, %s49
      %p53 = scmp.eq.s32.totalorder %s13, 0
      %p54 = por %p52, %p53
      %p55 = scmp.ne.s32.totalorder %s47, %s49
      %p56 = scmp.eq.s32.totalorder %s18, 1
      %p57 = por %p55, %p56
      %p58 = scmp.ne.s32.totalorder %s49, %s50
      %p59 = scmp.eq.s32.totalorder %s18, 0
      %p60 = por %p58, %p59
      %p61 = scmp.ne.s32.totalorder %s49, %s50
      %p62 = scmp.eq.s32.totalorder %s19, 1
      %p63 = por %p61, %p62
      %p65 = scmp.ne.s32.totalorder %s50, %s64
      %p66 = scmp.eq.s32.totalorder %s19, 0
      %p67 = por %p65, %p66
      %s69 = sadd.s32 %s68, 1
      %p72 = scmp.eq.s32.totalorder %s13, 1
      %p73 = scmp.ne.s32.totalorder %s68, %s70
      %p74 = scmp.eq.s32.totalorder %s13, 0
      %p75 = por %p73, %p74
      %p76 = scmp.ne.s32.totalorder %s68, %s70
      %p77 = scmp.eq.s32.totalorder %s18, 1
      %p78 = por %p76, %p77
      %p79 = scmp.ne.s32.totalorder %s70, %s71
      %p80 = scmp.eq.s32.totalorder %s18, 0
      %p81 = por %p79, %p80
      %p82 = scmp.ne.s32.totalorder %s70, %s71
      %p83 = scmp.eq.s32.totalorder %s19, 1
      %p84 = por %p82, %p83
      %p86 = scmp.ne.s32.totalorder %s71, %s85
      %p87 = scmp.eq.s32.totalorder %s19, 0
      %p88 = por %p86, %p87
      %s89 = ssub.s32 %s13, %s20
      %p90 = scmp.eq.s32.totalorder %s89, 0
      %s92 = sadd.s32 %s91, 1
      %s93 = scalar_select %p90, %s91, %s92
      %p96 = pneg %p90
      %p97 = scmp.eq.s32.totalorder %s13, 1
      %p98 = por %p96, %p97
      %p99 = scmp.ne.s32.totalorder %s91, %s94
      %p100 = scmp.eq.s32.totalorder %s13, 0
      %p101 = por %p99, %p100
      %p102 = scmp.ne.s32.totalorder %s91, %s94
      %p103 = scmp.eq.s32.totalorder %s18, 1
      %p104 = por %p102, %p103
      %p105 = scmp.ne.s32.totalorder %s94, %s95
      %p106 = scmp.eq.s32.totalorder %s18, 0
      %p107 = por %p105, %p106
      %p108 = scmp.ne.s32.totalorder %s94, %s95
      %p109 = scmp.eq.s32.totalorder %s19, 1
      %p110 = por %p108, %p109
      %p112 = scmp.ne.s32.totalorder %s95, %s111
      %p113 = scmp.eq.s32.totalorder %s19, 0
      %p114 = por %p112, %p113
      %p115 = scmp.le.s32.totalorder 1, %s13
      %p116 = scmp.lt.s32.totalorder %s13, 3
      %p117 = pnand %p115, %p116
      %p118 = pneg %p117
      // Predicated region
      $region9: #{tpu_custom_call.1} parent=5 // pred_check
        _
      $region10: #{tpu_custom_call.1} parent=5 // pred_check_branch
        %120 = sbr.rel (%p117) target = $region12
      $region11: #{tpu_custom_call.1} parent=5 // pred_region
        %s121 = ssub.s32 %s13, 1
        // Predicated region
        $region13: #{tpu_custom_call.1} parent=11 // pred_check
          %p122 = pneg %p60
        $region14: #{tpu_custom_call.1} parent=11 // pred_check_branch
          %124 = sbr.rel (%p122) target = $region16
        $region15: #{tpu_custom_call.1} parent=11 // pred_region
          _
        $region16: #{tpu_custom_call.1} parent=11 // pred_fallthru
          _
        // Predicated region
        $region17: #{tpu_custom_call.1} parent=11 // pred_check
          %p125 = pneg %p81
        $region18: #{tpu_custom_call.1} parent=11 // pred_check_branch
          %127 = sbr.rel (%p125) target = $region20
        $region19: #{tpu_custom_call.1} parent=11 // pred_region
          %s129 = ssub.s32 512, 512
          %130 = vsyncadd [#allocation3], %s129
          %s131 = sshll.u32 [#allocation2], 4
          %s132 = int_to_ptr.vmem [resolvable:$true] %s131
          %137 = dma.hbm_to_vmem [thread:$0]  %s2, 512, %s132, [#allocation3], 128, 128, 8
        $region20: #{tpu_custom_call.1} parent=11 // pred_fallthru
          _
      $region12: #{tpu_custom_call.1} parent=5 // pred_fallthru
        _
      %p138 = scmp.lt.s32.totalorder %s13, 2
      // Predicated region
      $region21: #{tpu_custom_call.1} parent=5 // pred_check
        %p139 = pneg %p138
      $region22: #{tpu_custom_call.1} parent=5 // pred_check_branch
        %141 = sbr.rel (%p139) target = $region24
      $region23: #{tpu_custom_call.1} parent=5 // pred_region
        // Predicated region
        $region25: #{tpu_custom_call.1} parent=23 // pred_check
          %p142 = pneg %p33
        $region26: #{tpu_custom_call.1} parent=23 // pred_check_branch
          %144 = sbr.rel (%p142) target = $region28
        $region27: #{tpu_custom_call.1} parent=23 // pred_region
          %p145 = scmp.lt.s32.totalorder %s13, 1
          %s146 = scalar_select %p145, %s13, 1
          %s147 = smul.addr %s146, 4
          %s148 = smul.addr %s147, 4
          %s149 = scalar_lea.vmem %s0, %s148
        $region28: #{tpu_custom_call.1} parent=23 // pred_fallthru
          _
      $region24: #{tpu_custom_call.1} parent=5 // pred_fallthru
        _
      %p150 = scmp.le.s32.totalorder 1, %s13
      %p151 = scmp.lt.s32.totalorder %s13, 3
      %p152 = pnand %p150, %p151
      %p153 = pneg %p152
      // Predicated region
      $region29: #{tpu_custom_call.1} parent=5 // pred_check
        _
      $region30: #{tpu_custom_call.1} parent=5 // pred_check_branch
        %155 = sbr.rel (%p152) target = $region32
      $region31: #{tpu_custom_call.1} parent=5 // pred_region
        %s156 = ssub.s32 %s13, 1
        // Predicated region
        $region33: #{tpu_custom_call.1} parent=31 // pred_check
          %p157 = pneg %p81
        $region34: #{tpu_custom_call.1} parent=31 // pred_check_branch
          %159 = sbr.rel (%p157) target = $region36
        $region35: #{tpu_custom_call.1} parent=31 // pred_region
          %160 = dma.done [#allocation3], 512
        $region36: #{tpu_custom_call.1} parent=31 // pred_fallthru
          _
        %p161 = scmp.lt.s32.totalorder %s18, 1
        %s162 = scalar_select %p161, %s18, 1
        %s163 = smul.addr %s162, 4
        %s164 = smul.addr %s163, 4
        %s165 = scalar_lea.vmem %s0, %s164
        %p166 = pneg %p39
        %p167 = pneg %p36
        %p168 = pneg %p60
        %p169 = pneg %p57
        %p170 = pneg %p81
        %p171 = pneg %p78
        %p172 = pneg %p107
        %p173 = pneg %p104
        %s174 = sand.u32 %s94, 1
        %s175 = scalar_lea.sflag [#allocation4], %s174
        %s176 = sand.u32 %s94, 1
        %s177 = smul.addr %s176, 16
        %s178 = scalar_lea.vmem [#allocation5], %s177
        %p179 = scmp.lt.s32.totalorder %s18, 1
        %s180 = scalar_select %p179, %s18, 1
        %s181 = smul.addr %s180, 4
        %s182 = smul.addr %s181, 4
        %s183 = scalar_lea.vmem %s0, %s182
        %v185 = vld [vmem:[%s183] sm:$0xf]
        %v186 = vld [vmem:[%s183 + $0x4] sm:$0xf]
        %v187 = vld [vmem:[%s183 + $0x8] sm:$0xf]
        %v188 = vld [vmem:[%s183 + $0xc] sm:$0xf]
        %v189 = vld [vmem:[%s1] sm:$0xf]
        %v190 = vld [vmem:[%s1 + $0x4] sm:$0xf]
        %v191 = vld [vmem:[%s1 + $0x8] sm:$0xf]
        %v192 = vld [vmem:[%s1 + $0xc] sm:$0xf]
        %v193 = vld [vmem:[%s1 + $0x10] sm:$0xf]
        %v194 = vld [vmem:[%s1 + $0x14] sm:$0xf]
        %v195 = vld [vmem:[%s1 + $0x18] sm:$0xf]
        %v196 = vld [vmem:[%s1 + $0x1c] sm:$0xf]
        %v197 = vld [vmem:[#allocation2] sm:$0xff]
        %v198 = vld [vmem:[#allocation2 + $0x8] sm:$0xff]
        %v199 = vld [vmem:[#allocation2 + $0x10] sm:$0xff]
        %v200 = vld [vmem:[#allocation2 + $0x18] sm:$0xff]
        %v205 = vunpack.c.l.b16 %v185
        %v206 = vunpack.c.l.b16 %v186
        %v207 = vunpack.c.l.b16 %v187
        %v208 = vunpack.c.l.b16 %v188
        %v209 = vpack.c.b16 %v206, %v205
        %v210 = vpack.c.b16 %v208, %v207
        %v219 = vunpack.c.l.b16 %v189
        %v220 = vunpack.c.l.b16 %v190
        %v221 = vunpack.c.l.b16 %v191
        %v222 = vunpack.c.l.b16 %v192
        %v223 = vunpack.c.l.b16 %v193
        %v224 = vunpack.c.l.b16 %v194
        %v225 = vunpack.c.l.b16 %v195
        %v226 = vunpack.c.l.b16 %v196
        %v227 = vpack.c.b16 %v220, %v219
        %v228 = vpack.c.b16 %v222, %v221
        %v229 = vpack.c.b16 %v224, %v223
        %v230 = vpack.c.b16 %v226, %v225
        %vm235 = vcmask 523264
        %v237 = vsel %vm235, %v209, 0
        %v240 = vsel %vm235, %v210, 0
        %242 = vmatprep.subr.bf16.mxu0 0
        %243 = vmatpush1.bf16.msra.mxu0 %v227
        %244 = vmatprep.subr.bf16.mxu0 0
        %245 = vmatpush1.bf16.msra.mxu0 %v228
        %246 = vmatprep.subr.bf16.mxu0 0
        %247 = vmatpush1.bf16.msra.mxu0 %v229
        %248 = vmatprep.subr.bf16.mxu0 0
        %249 = vmatpush1.bf16.msra.mxu0 %v230
        %250 = vmatprep.subr.bf16.mxu0 0
        %251 = vmatpush1.bf16.msra.mxu0 0
        %252 = vmatprep.subr.bf16.mxu0 0
        %253 = vmatpush1.bf16.msra.mxu0 0
        %254 = vmatprep.subr.bf16.mxu0 0
        %255 = vmatpush1.bf16.msra.mxu0 0
        %256 = vmatprep.subr.bf16.mxu0 0
        %257 = vmatpush1.bf16.msra.mxu0 0
        %258 = vmatprep.subr.bf16.mxu0 0
        %259 = vmatpush1.bf16.msra.mxu0 0
        %260 = vmatprep.subr.bf16.mxu0 0
        %261 = vmatpush1.bf16.msra.mxu0 0
        %262 = vmatprep.subr.bf16.mxu0 0
        %263 = vmatpush1.bf16.msra.mxu0 0
        %264 = vmatprep.subr.bf16.mxu0 0
        %265 = vmatpush1.bf16.msra.mxu0 0
        %266 = vmatprep.subr.bf16.mxu0 0
        %267 = vmatpush1.bf16.msra.mxu0 0
        %268 = vmatprep.subr.bf16.mxu0 0
        %269 = vmatpush1.bf16.msra.mxu0 0
        %270 = vmatprep.subr.bf16.mxu0 0
        %271 = vmatpush1.bf16.msra.mxu0 0
        %272 = vmatprep.subr.bf16.mxu0 0
        %273 = vmatpush1.bf16.msra.mxu0 0
        %274 = vmatprep.mubr.bf16.mxu0 0
        %275 = vmatmul.mubr.bf16.gmra.mrb[0].mxu0 %v237
        %v276 = vpop.f32.mrb[0].mxu0
        %v277 = vadd.f32 %v197, %v276
        %v278 = vpop.f32.mrb[0].mxu0
        %v279 = vpop.f32.mrb[0].mxu0
        %v280 = vadd.f32 %v198, %v279
        %v281 = vpop.f32.mrb[0].mxu0
        %282 = vmatprep.mubr.bf16.mxu0 0
        %283 = vmatmul.mubr.bf16.gmra.mrb[0].mxu0 %v240
        %v284 = vpop.f32.mrb[0].mxu0
        %v285 = vadd.f32 %v199, %v284
        %v286 = vpop.f32.mrb[0].mxu0
        %v287 = vpop.f32.mrb[0].mxu0
        %v288 = vadd.f32 %v200, %v287
        %v289 = vpop.f32.mrb[0].mxu0
        %290 = vdwg.mxu0
        %v291 = vpack.c.bf16 %v280, %v277
        %v292 = vpack.c.bf16 %v288, %v285
        %v295 = vunpack.c.l.b16 %v291
        %v296 = vunpack.c.h.b16 %v291
        %v297 = vunpack.c.l.b16 %v292
        %v298 = vunpack.c.h.b16 %v292
        %v299 = vpack.c.b16 %v295, %v295
        %v300 = vpack.c.b16 %v296, %v296
        %v301 = vpack.c.b16 %v297, %v297
        %v302 = vpack.c.b16 %v298, %v298
        %vm307 = vcmask 257024
        %308 = vst.msk [vmem:[%s178] sm:$0xf] %vm307, %v299
        %309 = vst.msk [vmem:[%s178 + $0x4] sm:$0xf] %vm307, %v300
        %310 = vst.msk [vmem:[%s178 + $0x8] sm:$0xf] %vm307, %v301
        %311 = vst.msk [vmem:[%s178 + $0xc] sm:$0xf] %vm307, %v302
        %s312 = sand.u32 %s94, 1
        %s313 = scalar_lea.sflag [#allocation4], %s312
        %s314 = sand.u32 %s94, 1
        %s315 = smul.addr %s314, 16
        %s316 = scalar_lea.vmem [#allocation5], %s315
        // Predicated region
        $region37: #{tpu_custom_call.1} parent=31 // pred_check
          %p317 = pneg %p104
        $region38: #{tpu_custom_call.1} parent=31 // pred_check_branch
          %319 = sbr.rel (%p317) target = $region40
        $region39: #{tpu_custom_call.1} parent=31 // pred_region
          %s321 = ssub.s32 256, 256
          %322 = vsyncadd %s313, %s321
          %s323 = smul.addr %s18, 4
          %s324 = smul.addr %s323, 64
          %s325 = scalar_lea.hbm %s3, %s324
          %s326 = sshll.u32 %s316, 4
          %s327 = int_to_ptr.vmem [resolvable:$true] %s326
          %332 = dma.vmem_to_hbm [thread:$0]  %s327, 256, %s325, %s313, 64, 64, 4
        $region40: #{tpu_custom_call.1} parent=31 // pred_fallthru
          _
      $region32: #{tpu_custom_call.1} parent=5 // pred_fallthru
        _
      %p333 = scmp.le.s32.totalorder 2, %s13
      // Predicated region
      $region41: #{tpu_custom_call.1} parent=5 // pred_check
        %p334 = pneg %p333
      $region42: #{tpu_custom_call.1} parent=5 // pred_check_branch
        %336 = sbr.rel (%p334) target = $region44
      $region43: #{tpu_custom_call.1} parent=5 // pred_region
        %s337 = ssub.s32 %s13, 2
        // Predicated region
        $region45: #{tpu_custom_call.1} parent=43 // pred_check
          %p338 = pneg %p110
        $region46: #{tpu_custom_call.1} parent=43 // pred_check_branch
          %340 = sbr.rel (%p338) target = $region48
        $region47: #{tpu_custom_call.1} parent=43 // pred_region
          %s341 = sand.u32 %s95, 1
          %s342 = scalar_lea.sflag [#allocation4], %s341
          %s343 = sand.u32 %s95, 1
          %s344 = smul.addr %s343, 16
          %s345 = scalar_lea.vmem [#allocation5], %s344
          %346 = dma.done %s342, 256
        $region48: #{tpu_custom_call.1} parent=43 // pred_fallthru
          _
      $region44: #{tpu_custom_call.1} parent=5 // pred_fallthru
        _
    $region6: #{tpu_custom_call.1} parent=1 // loop_footer
      %s17 = sadd.s32 1, %s13
    $region7: #{tpu_custom_call.1} parent=1 // loop_footer_branch
      %12 = sbr.rel target = $region3
    $region8: #{tpu_custom_call.1} parent=1 // loop_exit
      _
    %347 = vsyncpa [#allocation3], 1
    %s348 = scalar_lea.sflag [#allocation3], 1
    %349 = vsyncpa %s348, 1
    %350 = vsyncpa [#allocation4], 1
    %s351 = scalar_lea.sflag [#allocation4], 1
    %352 = vsyncpa %s351, 1

</llo_original>
